<compile_context>
chip_gen: v7x
topology: tpu7x:2x2x1
jax: 0.10.0
libtpu: 0.0.40
codegen_flags: <defaults>
</compile_context>

<pallas_src>
import jax
import jax.numpy as jnp
import numpy as np
from jax import lax
from jax.experimental import pallas as pl
from jax.experimental.pallas import tpu as pltpu

K = 3  # kernel_size


def _make_kernel(Wp, L):
    def kernel(x_ref, w_ref, b_ref, o_ref, acc_ref):
        # x_ref  : (1, 1, C, L)        one input frame, flat zero-padded spatial in lanes
        # w_ref  : (1, Cout, K*K*C)    folded weights for this kt (cols ordered kh,kw,cin)
        # b_ref  : (Cout, 1)           folded bias, f32
        # o_ref  : (1, 1, Cout, L)     transposed, lane-dense output frame
        # acc_ref: (Cout, L) f32       accumulator across the kt grid axis
        kt = pl.program_id(2)

        @pl.when(kt == 0)
        def _init():
            # bias folded into the accumulator init -> added exactly once per output tile
            acc_ref[...] = jnp.broadcast_to(b_ref[...], acc_ref.shape)

        x = x_ref[0, 0]                                   # (C, L), input dtype
        # Spatial taps = lane rotations of the flat slab (XLU, overlaps the MXU);
        # concatenate along sublanes only (aligned copies, no lane relayout).
        taps = []
        for kh in range(K):
            for kw in range(K):
                d = kh * Wp + kw
                taps.append(x if d == 0 else pltpu.roll(x, shift=L - d, axis=1))
        rhs = jnp.concatenate(taps, axis=0)               # (K*K*C, L)

        # Single MXU matmul per kt:  (Cout, K*K*C) @ (K*K*C, L), N = L >= 128.
        acc_ref[...] += jnp.dot(w_ref[0], rhs, preferred_element_type=jnp.float32)

        @pl.when(kt == pl.num_programs(2) - 1)
        def _fin():
            o_ref[0, 0] = acc_ref[...].astype(o_ref.dtype)

    return kernel


def time_downsample_res2x(x, conv_w, conv_b, mix_factor):
    """x: (B, C, T, H, W) NCDHW.  conv_w: (Cout, Cin, K, K, K) (OIDHW).  Returns NCDHW."""
    B, C, T, H, W = x.shape
    Cout = conv_w.shape[0]
    assert Cout == C, "residual mix requires in_channels == out_channels"

    alpha = jax.nn.sigmoid(mix_factor.astype(jnp.float32))[0]

    # ---- Fold  alpha*avg_pool + (1-alpha)*(conv + bias)  into a single conv.
    w_eff = (1.0 - alpha) * conv_w.astype(jnp.float32)            # (Cout, Cin, kt, kh, kw)
    eye = jnp.eye(C, dtype=jnp.float32)
    w_eff = w_eff.at[:, :, :, K // 2, K // 2].add((alpha / K) * eye[:, :, None])
    b_eff = ((1.0 - alpha) * conv_b.astype(jnp.float32)).reshape(Cout, 1)

    # Per-kt weight matrix (kt, Cout, K*K*Cin); columns ordered (kh, kw, cin) to match
    # the kernel's sublane concat.  Keep MXU operands in the input dtype (bf16 on the
    # perf path); f32 accumulation happens in the kernel.
    w_mat = jnp.transpose(w_eff, (2, 0, 3, 4, 1)).reshape(K, Cout, K * K * C).astype(x.dtype)

    Hp, Wp = H + 2, W + 2
    Np = Hp * Wp
    L = ((Np + 127) // 128) * 128          # lane-pad flattened spatial to a multiple of 128

    # Single wrapper pass over the video (XLA fuses the transpose with the pads):
    # channels to sublanes, flattened zero-padded spatial to lanes.  No time padding,
    # no window stack: both live in the index_map below.
    x_t = jnp.transpose(x, (0, 2, 1, 3, 4))                                  # (B,T,C,H,W)
    x_p = jnp.pad(x_t, ((0, 0), (0, 0), (0, 0), (1, 1), (1, 1)))             # (B,T,C,Hp,Wp)
    x_flat = jnp.pad(x_p.reshape(B, T, C, Np),
                     ((0, 0), (0, 0), (0, 0), (0, L - Np)))                  # (B,T,C,L)

    T_out = (T - 1) // 2 + 1
    kernel = _make_kernel(Wp, L)

    out_flat = pl.pallas_call(
        kernel,
        out_shape=jax.ShapeDtypeStruct((B, T_out, Cout, L), x.dtype),
        grid=(B, T_out, K),
        in_specs=[
            # one original frame per step; clamping realises the replicate-first-frame pad
            pl.BlockSpec((1, 1, C, L),
                         lambda b, t, kt: (b, jnp.maximum(2 * t + kt - (K - 1), 0), 0, 0)),
            pl.BlockSpec((1, Cout, K * K * C), lambda b, t, kt: (kt, 0, 0)),
            pl.BlockSpec((Cout, 1), lambda b, t, kt: (0, 0)),
        ],
        out_specs=pl.BlockSpec((1, 1, Cout, L), lambda b, t, kt: (b, t, 0, 0)),
        scratch_shapes=[pltpu.VMEM((Cout, L), jnp.float32)],
        compiler_params=pltpu.CompilerParams(
            dimension_semantics=("parallel", "parallel", "arbitrary")),
        # For production shapes: add an H-tile grid axis and set vmem_limit_bytes here.
    )(x_flat, w_mat, b_eff)

    # Drop spatial-pad / lane-pad junk columns and return to NCDHW.
    out = out_flat[:, :, :, :H * Wp].reshape(B, T_out, Cout, H, Wp)[:, :, :, :, :W]
    return jnp.transpose(out, (0, 2, 1, 3, 4))


def reference(x, conv_w, conv_b, mix_factor):
    """Plain-JAX reference mirroring the PyTorch forward (for verification)."""
    alpha = jax.nn.sigmoid(mix_factor)[0]
    first = jnp.repeat(x[:, :, :1], K - 1, axis=2)
    xp = jnp.concatenate([first, x], axis=2)
    T_pad = xp.shape[2]
    T_out = (T_pad - K) // 2 + 1
    avg = jnp.stack(
        [jnp.mean(xp[:, :, 2 * t:2 * t + K], axis=2) for t in range(T_out)], axis=2)
    conv = lax.conv_general_dilated(
        xp, conv_w, window_strides=(2, 1, 1),
        padding=[(0, 0), (1, 1), (1, 1)],
        dimension_numbers=("NCDHW", "OIDHW", "NCDHW"),
        precision=lax.Precision.HIGHEST)
    conv = conv + conv_b.reshape(1, -1, 1, 1, 1)
    return alpha * avg + (1.0 - alpha) * conv


if __name__ == "__main__":
    key = jax.random.PRNGKey(0)
    B, C, T, H, W = 2, 8, 8, 16, 16
    k1, k2, k3 = jax.random.split(key, 3)

    x = jax.random.normal(k1, (B, C, T, H, W), jnp.float32)
    conv_w = 0.05 * jax.random.normal(k2, (C, C, K, K, K), jnp.float32)
    conv_b = 0.05 * jax.random.normal(k3, (C,), jnp.float32)
    mix_factor = jnp.array([2.0], jnp.float32)

    out = jax.block_until_ready(time_downsample_res2x(x, conv_w, conv_b, mix_factor))
    ref = jax.block_until_ready(reference(x, conv_w, conv_b, mix_factor))

    assert out.shape == ref.shape == (B, C, (T - 1) // 2 + 1, H, W)
    np.testing.assert_allclose(np.asarray(out), np.asarray(ref), rtol=5e-3, atol=5e-3)
    print("KERNEL_OK")
</pallas_src>

<mosaic_0001>
module attributes {stable_mosaic.version = 11 : i64} {
  func.func @kernel(%arg0: i32, %arg1: i32, %arg2: i32, %arg3: memref<1x1x8x384xf32, #tpu.memory_space<vmem>>, %arg4: memref<1x8x72xf32, #tpu.memory_space<vmem>>, %arg5: memref<8x1xf32, #tpu.memory_space<vmem>>, %arg6: memref<1x1x8x384xf32, #tpu.memory_space<vmem>>, %arg7: memref<8x384xf32, #tpu.memory_space<vmem>>) attributes {dimension_semantics = [#tpu.dimension_semantics<parallel>, #tpu.dimension_semantics<parallel>, #tpu.dimension_semantics<arbitrary>], iteration_bounds = array<i64: 2, 4, 3>, scalar_prefetch = 0 : i64, scratch_operands = 1 : i64, tpu.core_type = #tpu.core_type<tc>, window_params = [{transform_indices = @transform_0, window_bounds = array<i64: 1, 1, 8, 384>}, {transform_indices = @transform_1, window_bounds = array<i64: 1, 8, 72>}, {pipeline_mode = #tpu.pipeline_mode<synchronous>, transform_indices = @transform_2, window_bounds = array<i64: 8, 1>}, {transform_indices = @transform_3, window_bounds = array<i64: 1, 1, 8, 384>}]} {
    %c0_i32 = arith.constant 0 : i32
    %0 = arith.cmpi eq, %arg2, %c0_i32 : i32
    %1 = arith.extui %0 : i1 to i32
    %c0_i32_0 = arith.constant 0 : i32
    %2 = arith.cmpi ne, %1, %c0_i32_0 : i32
    scf.if %2 {
      %c0_12 = arith.constant 0 : index
      %c0_13 = arith.constant 0 : index
      %23 = vector.load %arg5[%c0_12, %c0_13] : memref<8x1xf32, #tpu.memory_space<vmem>>, vector<8x1xf32>
      %24 = vector.shape_cast %23 : vector<8x1xf32> to vector<8x1xf32>
      %25 = vector.broadcast %24 : vector<8x1xf32> to vector<8x384xf32>
      %c0_14 = arith.constant 0 : index
      %c0_15 = arith.constant 0 : index
      %26 = vector.load %arg7[%c0_14, %c0_15] : memref<8x384xf32, #tpu.memory_space<vmem>>, vector<8x384xf32>
      tpu.vector_store %arg7[%c0_14, %c0_15], %25 {strides = array<i32>} : memref<8x384xf32, #tpu.memory_space<vmem>>, vector<8x384xf32>,
    } else {
    }
    %c0 = arith.constant 0 : index
    %c0_1 = arith.constant 0 : index
    %c0_2 = arith.constant 0 : index
    %c0_3 = arith.constant 0 : index
    %3 = vector.load %arg3[%c0, %c0_1, %c0_2, %c0_3] : memref<1x1x8x384xf32, #tpu.memory_space<vmem>>, vector<1x1x8x384xf32>
    %4 = vector.shape_cast %3 : vector<1x1x8x384xf32> to vector<8x384xf32>
    %c383_i32 = arith.constant 383 : i32
    %5 = tpu.dynamic_rotate %4 by %c383_i32 dim 1 : vector<8x384xf32>, i32 -> vector<8x384xf32>
    %c382_i32 = arith.constant 382 : i32
    %6 = tpu.dynamic_rotate %4 by %c382_i32 dim 1 : vector<8x384xf32>, i32 -> vector<8x384xf32>
    %c366_i32 = arith.constant 366 : i32
    %7 = tpu.dynamic_rotate %4 by %c366_i32 dim 1 : vector<8x384xf32>, i32 -> vector<8x384xf32>
    %c365_i32 = arith.constant 365 : i32
    %8 = tpu.dynamic_rotate %4 by %c365_i32 dim 1 : vector<8x384xf32>, i32 -> vector<8x384xf32>
    %c364_i32 = arith.constant 364 : i32
    %9 = tpu.dynamic_rotate %4 by %c364_i32 dim 1 : vector<8x384xf32>, i32 -> vector<8x384xf32>
    %c348_i32 = arith.constant 348 : i32
    %10 = tpu.dynamic_rotate %4 by %c348_i32 dim 1 : vector<8x384xf32>, i32 -> vector<8x384xf32>
    %c347_i32 = arith.constant 347 : i32
    %11 = tpu.dynamic_rotate %4 by %c347_i32 dim 1 : vector<8x384xf32>, i32 -> vector<8x384xf32>
    %c346_i32 = arith.constant 346 : i32
    %12 = tpu.dynamic_rotate %4 by %c346_i32 dim 1 : vector<8x384xf32>, i32 -> vector<8x384xf32>
    %13 = tpu.concatenate %4, %5, %6, %7, %8, %9, %10, %11, %12 in 0 : vector<8x384xf32>, vector<8x384xf32>, vector<8x384xf32>, vector<8x384xf32>, vector<8x384xf32>, vector<8x384xf32>, vector<8x384xf32>, vector<8x384xf32>, vector<8x384xf32> -> vector<72x384xf32>
    %c0_4 = arith.constant 0 : index
    %c0_5 = arith.constant 0 : index
    %14 = vector.load %arg7[%c0_4, %c0_5] : memref<8x384xf32, #tpu.memory_space<vmem>>, vector<8x384xf32>
    %c0_6 = arith.constant 0 : index
    %c0_7 = arith.constant 0 : index
    %c0_8 = arith.constant 0 : index
    %15 = vector.load %arg4[%c0_6, %c0_7, %c0_8] : memref<1x8x72xf32, #tpu.memory_space<vmem>>, vector<1x8x72xf32>
    %16 = vector.shape_cast %15 : vector<1x8x72xf32> to vector<8x72xf32>
    %cst = arith.constant dense<0.000000e+00> : vector<8x384xf32>
    %17 = tpu.matmul %16, %13, %cst {dimension_numbers = #tpu.dot_dimension_numbers<[1], [0], [0], [1], [0, 0, 1, 1], [], []>} : vector<8x72xf32>, vector<72x384xf32>, vector<8x384xf32> -> vector<8x384xf32>
    %18 = arith.addf %14, %17 : vector<8x384xf32>
    %c0_9 = arith.constant 0 : index
    %c0_10 = arith.constant 0 : index
    %19 = vector.load %arg7[%c0_9, %c0_10] : memref<8x384xf32, #tpu.memory_space<vmem>>, vector<8x384xf32>
    tpu.vector_store %arg7[%c0_9, %c0_10], %18 {strides = array<i32>} : memref<8x384xf32, #tpu.memory_space<vmem>>, vector<8x384xf32>,
    %c2_i32 = arith.constant 2 : i32
    %20 = arith.cmpi eq, %arg2, %c2_i32 : i32
    %21 = arith.extui %20 : i1 to i32
    %c0_i32_11 = arith.constant 0 : i32
    %22 = arith.cmpi ne, %21, %c0_i32_11 : i32
    scf.if %22 {
      %c0_12 = arith.constant 0 : index
      %c0_13 = arith.constant 0 : index
      %23 = vector.load %arg7[%c0_12, %c0_13] : memref<8x384xf32, #tpu.memory_space<vmem>>, vector<8x384xf32>
      %c0_14 = arith.constant 0 : index
      %c0_15 = arith.constant 0 : index
      %c0_16 = arith.constant 0 : index
      %c0_17 = arith.constant 0 : index
      %24 = vector.load %arg6[%c0_14, %c0_15, %c0_16, %c0_17] : memref<1x1x8x384xf32, #tpu.memory_space<vmem>>, vector<1x1x8x384xf32>
      %25 = vector.shape_cast %24 : vector<1x1x8x384xf32> to vector<8x384xf32>
      %26 = vector.shape_cast %23 : vector<8x384xf32> to vector<1x1x8x384xf32>
      tpu.vector_store %arg6[%c0_14, %c0_15, %c0_16, %c0_17], %26 {strides = array<i32>} : memref<1x1x8x384xf32, #tpu.memory_space<vmem>>, vector<1x1x8x384xf32>,
    } else {
    }
    return
  }
  func.func @transform_0(%arg0: i32, %arg1: i32, %arg2: i32) -> (i32, i32, i32, i32) {
    %c2_i32 = arith.constant 2 : i32
    %0 = arith.muli %c2_i32, %arg1 : i32
    %1 = arith.addi %0, %arg2 : i32
    %c2_i32_0 = arith.constant 2 : i32
    %2 = arith.subi %1, %c2_i32_0 : i32
    %c0_i32 = arith.constant 0 : i32
    %3 = arith.maxsi %2, %c0_i32 : i32
    %c0_i32_1 = arith.constant 0 : i32
    %c0_i32_2 = arith.constant 0 : i32
    %c0_i32_3 = arith.constant 0 : i32
    return %arg0, %3, %c0_i32_1, %c0_i32_2 : i32, i32, i32, i32
  }
  func.func @transform_1(%arg0: i32, %arg1: i32, %arg2: i32) -> (i32, i32, i32) {
    %c0_i32 = arith.constant 0 : i32
    %c0_i32_0 = arith.constant 0 : i32
    %c0_i32_1 = arith.constant 0 : i32
    return %arg2, %c0_i32, %c0_i32_0 : i32, i32, i32
  }
  func.func @transform_2(%arg0: i32, %arg1: i32, %arg2: i32) -> (i32, i32) {
    %c0_i32 = arith.constant 0 : i32
    %c0_i32_0 = arith.constant 0 : i32
    %c0_i32_1 = arith.constant 0 : i32
    return %c0_i32, %c0_i32_0 : i32, i32
  }
  func.func @transform_3(%arg0: i32, %arg1: i32, %arg2: i32) -> (i32, i32, i32, i32) {
    %c0_i32 = arith.constant 0 : i32
    %c0_i32_0 = arith.constant 0 : i32
    %c0_i32_1 = arith.constant 0 : i32
    return %arg0, %arg1, %c0_i32, %c0_i32_0 : i32, i32, i32, i32
  }
}

</mosaic_0001>

<llo_original>
// kernel: tpu_custom_call.1
$region0: #{tpu_custom_call.1}
  #allocation0 [shape = 'u32[]', space=smem, size = 0x4, offset = 0x4, fixed_abs, tag = 'smem constant byte address 0x4 - core index']
  #allocation1 [shape = 'u32[144,128]{1,0:T(1,128)}', space=vmem, size = 0x12000, scoped, tag = 'internal scratch']
  #allocation2 [shape = 'f32[8,384]{1,0:T(8,128)}', space=vmem, size = 0x3000, scoped, tag = 'scratch operand']
  %s0 = inlined_call_operand.hbm [shape: f32[2,8,8,384], index: 0, kind: input, shape index: {}]
  %s1 = inlined_call_operand.hbm [shape: f32[3,8,72], index: 1, kind: input, shape index: {}]
  %s2 = inlined_call_operand.vmem [shape: f32[8,1], index: 2, kind: input, shape index: {}]
  %s3 = inlined_call_operand.hbm [shape: f32[2,4,8,384], index: 3, kind: output, shape index: {}]
  %s4 = sld [smem:[#allocation0]]
  $region61: #{tpu_custom_call.1} parent=0
    _
  %s6 = ssub.s32 1, %s4
  %s7 = scalar_select 0, %s6, %s4
  $region1: #{tpu_custom_call.1} parent=0
    #allocation3 [shape = 'u8[24576]{0}', space=vmem, size = 0x6000, scoped, tag = 'input window, operand 0']
    #allocation4 [shape = 's32[2]{0}', space=sflag, size = 0x8, scoped, tag = 'scoped memory for tpu_custom_call.1']
    #allocation5 [shape = 's32[2]{0}', space=sflag, size = 0x8, scoped, tag = 'scoped memory for tpu_custom_call.1']
    #allocation6 [shape = 'u8[8192]{0}', space=vmem, size = 0x2000, scoped, tag = 'input window, operand 1']
    #allocation7 [shape = 's32[2]{0}', space=sflag, size = 0x8, scoped, tag = 'scoped memory for tpu_custom_call.1']
    #allocation8 [shape = 'u8[24576]{0}', space=vmem, size = 0x6000, scoped, tag = 'output window, operand 0']
    %8 = vsyncpa [#allocation4], 0
    %s9 = scalar_lea.sflag [#allocation4], 1
    %10 = vsyncpa %s9, 0
    %11 = vsyncpa [#allocation7], 0
    %s12 = scalar_lea.sflag [#allocation7], 1
    %13 = vsyncpa %s12, 0
    %14 = vsyncpa [#allocation5], 0
    %s15 = scalar_lea.sflag [#allocation5], 1
    %16 = vsyncpa %s15, 0
    loop: start=0, step=1, limit=26
    $region2: #{tpu_custom_call.1} parent=1 // loop_pre_header
      _
    $region3: #{tpu_custom_call.1} parent=1 // loop_header
      %s18 = sphi 0, %s22
      %p19 = scmp.ge.s32.totalorder %s18, 26
      %s25 = sphi 0, %s44
      %s26 = sphi 0, %s40
      %s27 = sphi 0, %s36
      %s28 = sphi 0, %s25
      %s29 = sphi 0, %s26
      %s30 = sphi 0, %s27
      %s31 = sphi 0, %s28
      %s32 = sphi 0, %s29
      %s33 = sphi 0, %s30
      %s59 = sphi 0, %s61
      %s62 = sphi 0, %s59
      %s63 = sphi 0, %s62
      %s79 = sphi 0, %s63
      %s85 = sphi 0, %s87
      %s88 = sphi 0, %s85
      %s89 = sphi 0, %s88
      %s105 = sphi 0, %s89
      %s109 = sphi 0, %s109
      %s111 = sphi 0, %s109
      %s112 = sphi 0, %s111
      %s126 = sphi 0, %s112
      %s134 = sphi 0, %s136
      %s137 = sphi 0, %s134
      %s138 = sphi 0, %s137
      %s154 = sphi 0, %s138
    $region4: #{tpu_custom_call.1} parent=1 // loop_header_branch
      %21 = sbr.rel (%p19) target = $region8
    $region5: #{tpu_custom_call.1} parent=1 // loop_body
      %s23 = ssub.s32 %s18, 1
      %s24 = ssub.s32 %s18, 2
      %s34 = sadd.s32 1, %s27
      %p35 = scmp.ge.s32.totalorder %s34, 3
      %s36 = scalar_select %p35, 0, %s34
      %s37 = sadd.s32 1, %s26
      %s38 = scalar_select %p35, %s37, %s26
      %p39 = scmp.ge.s32.totalorder %s38, 4
      %s40 = scalar_select %p39, 0, %s38
      %s41 = sadd.s32 1, %s25
      %s42 = scalar_select %p39, %s41, %s25
      %p43 = scmp.ge.s32.totalorder %s42, 2
      %s44 = scalar_select %p43, 0, %s42
      %s45 = smul.u32 %s26, 2
      %s46 = sadd.s32 %s45, %s27
      %s47 = ssub.s32 %s46, 2
      %p48 = scmp.gt.s32.totalorder %s47, 0
      %s49 = scalar_select %p48, %s47, 0
      %s50 = smul.u32 %s40, 2
      %s51 = sadd.s32 %s50, %s36
      %s52 = ssub.s32 %s51, 2
      %p53 = scmp.gt.s32.totalorder %s52, 0
      %s54 = scalar_select %p53, %s52, 0
      %s55 = ssub.s32 %s25, %s44
      %s56 = ssub.s32 %s49, %s54
      %s57 = sor.u32 %s55, %s56
      %p58 = scmp.eq.s32.totalorder %s57, 0
      %s60 = sadd.s32 %s59, 1
      %s61 = scalar_select %p58, %s59, %s60
      %p64 = pneg %p58
      %p65 = scmp.eq.s32.totalorder %s18, 23
      %p66 = por %p64, %p65
      %p67 = scmp.ne.s32.totalorder %s59, %s62
      %p68 = scmp.eq.s32.totalorder %s18, 0
      %p69 = por %p67, %p68
      %p70 = scmp.ne.s32.totalorder %s59, %s62
      %p71 = scmp.eq.s32.totalorder %s23, 23
      %p72 = por %p70, %p71
      %p73 = scmp.ne.s32.totalorder %s62, %s63
      %p74 = scmp.eq.s32.totalorder %s23, 0
      %p75 = por %p73, %p74
      %p76 = scmp.ne.s32.totalorder %s62, %s63
      %p77 = scmp.eq.s32.totalorder %s24, 23
      %p78 = por %p76, %p77
      %p80 = scmp.ne.s32.totalorder %s63, %s79
      %p81 = scmp.eq.s32.totalorder %s24, 0
      %p82 = por %p80, %p81
      %s83 = ssub.s32 %s27, %s36
      %p84 = scmp.eq.s32.totalorder %s83, 0
      %s86 = sadd.s32 %s85, 1
      %s87 = scalar_select %p84, %s85, %s86
      %p90 = pneg %p84
      %p91 = scmp.eq.s32.totalorder %s18, 23
      %p92 = por %p90, %p91
      %p93 = scmp.ne.s32.totalorder %s85, %s88
      %p94 = scmp.eq.s32.totalorder %s18, 0
      %p95 = por %p93, %p94
      %p96 = scmp.ne.s32.totalorder %s85, %s88
      %p97 = scmp.eq.s32.totalorder %s23, 23
      %p98 = por %p96, %p97
      %p99 = scmp.ne.s32.totalorder %s88, %s89
      %p100 = scmp.eq.s32.totalorder %s23, 0
      %p101 = por %p99, %p100
      %p102 = scmp.ne.s32.totalorder %s88, %s89
      %p103 = scmp.eq.s32.totalorder %s24, 23
      %p104 = por %p102, %p103
      %p106 = scmp.ne.s32.totalorder %s89, %s105
      %p107 = scmp.eq.s32.totalorder %s24, 0
      %p108 = por %p106, %p107
      %s110 = sadd.s32 %s109, 1
      %p113 = scmp.eq.s32.totalorder %s18, 23
      %p114 = scmp.ne.s32.totalorder %s109, %s111
      %p115 = scmp.eq.s32.totalorder %s18, 0
      %p116 = por %p114, %p115
      %p117 = scmp.ne.s32.totalorder %s109, %s111
      %p118 = scmp.eq.s32.totalorder %s23, 23
      %p119 = por %p117, %p118
      %p120 = scmp.ne.s32.totalorder %s111, %s112
      %p121 = scmp.eq.s32.totalorder %s23, 0
      %p122 = por %p120, %p121
      %p123 = scmp.ne.s32.totalorder %s111, %s112
      %p124 = scmp.eq.s32.totalorder %s24, 23
      %p125 = por %p123, %p124
      %p127 = scmp.ne.s32.totalorder %s112, %s126
      %p128 = scmp.eq.s32.totalorder %s24, 0
      %p129 = por %p127, %p128
      %s130 = ssub.s32 %s25, %s44
      %s131 = ssub.s32 %s26, %s40
      %s132 = sor.u32 %s130, %s131
      %p133 = scmp.eq.s32.totalorder %s132, 0
      %s135 = sadd.s32 %s134, 1
      %s136 = scalar_select %p133, %s134, %s135
      %p139 = pneg %p133
      %p140 = scmp.eq.s32.totalorder %s18, 23
      %p141 = por %p139, %p140
      %p142 = scmp.ne.s32.totalorder %s134, %s137
      %p143 = scmp.eq.s32.totalorder %s18, 0
      %p144 = por %p142, %p143
      %p145 = scmp.ne.s32.totalorder %s134, %s137
      %p146 = scmp.eq.s32.totalorder %s23, 23
      %p147 = por %p145, %p146
      %p148 = scmp.ne.s32.totalorder %s137, %s138
      %p149 = scmp.eq.s32.totalorder %s23, 0
      %p150 = por %p148, %p149
      %p151 = scmp.ne.s32.totalorder %s137, %s138
      %p152 = scmp.eq.s32.totalorder %s24, 23
      %p153 = por %p151, %p152
      %p155 = scmp.ne.s32.totalorder %s138, %s154
      %p156 = scmp.eq.s32.totalorder %s24, 0
      %p157 = por %p155, %p156
      %p158 = scmp.le.s32.totalorder 1, %s18
      %p159 = scmp.lt.s32.totalorder %s18, 25
      %p160 = pnand %p158, %p159
      %p161 = pneg %p160
      // Predicated region
      $region9: #{tpu_custom_call.1} parent=5 // pred_check
        _
      $region10: #{tpu_custom_call.1} parent=5 // pred_check_branch
        %163 = sbr.rel (%p160) target = $region12
      $region11: #{tpu_custom_call.1} parent=5 // pred_region
        %s164 = ssub.s32 %s18, 1
        // Predicated region
        $region13: #{tpu_custom_call.1} parent=11 // pred_check
          %p165 = pneg %p122
        $region14: #{tpu_custom_call.1} parent=11 // pred_check_branch
          %167 = sbr.rel (%p165) target = $region16
        $region15: #{tpu_custom_call.1} parent=11 // pred_region
          _
        $region16: #{tpu_custom_call.1} parent=11 // pred_fallthru
          _
      $region12: #{tpu_custom_call.1} parent=5 // pred_fallthru
        _
      %p168 = scmp.lt.s32.totalorder %s18, 24
      // Predicated region
      $region17: #{tpu_custom_call.1} parent=5 // pred_check
        %p169 = pneg %p168
      $region18: #{tpu_custom_call.1} parent=5 // pred_check_branch
        %171 = sbr.rel (%p169) target = $region20
      $region19: #{tpu_custom_call.1} parent=5 // pred_region
        // Predicated region
        $region21: #{tpu_custom_call.1} parent=19 // pred_check
          %p172 = pneg %p69
        $region22: #{tpu_custom_call.1} parent=19 // pred_check_branch
          %174 = sbr.rel (%p172) target = $region24
        $region23: #{tpu_custom_call.1} parent=19 // pred_region
          %s175 = sand.u32 %s59, 1
          %s176 = scalar_lea.sflag [#allocation4], %s175
          %s177 = sand.u32 %s59, 1
          %s178 = smul.addr %s177, 24
          %s179 = scalar_lea.vmem [#allocation3], %s178
          %s180 = smul.u32 %s26, 2
          %s181 = sadd.s32 %s180, %s27
          %s182 = ssub.s32 %s181, 2
          %p183 = scmp.gt.s32.totalorder %s182, 0
          %s184 = scalar_select %p183, %s182, 0
          %s186 = ssub.s32 384, 384
          %187 = vsyncadd %s176, %s186
          %s188 = smul.addr %s184, 3
          %s189 = smul.addr %s25, 24
          %s190 = sadd.s32 %s188, %s189
          %s191 = smul.addr %s190, 128
          %s192 = scalar_lea.hbm %s0, %s191
          %s194 = sshll.u32 %s179, 4
          %s195 = int_to_ptr.vmem [resolvable:$true] %s194
          %197 = dma.hbm_to_vmem [thread:$0]  %s192, 384, %s195, %s176
        $region24: #{tpu_custom_call.1} parent=19 // pred_fallthru
          _
        // Predicated region
        $region25: #{tpu_custom_call.1} parent=19 // pred_check
          %p198 = pneg %p95
        $region26: #{tpu_custom_call.1} parent=19 // pred_check_branch
          %200 = sbr.rel (%p198) target = $region28
        $region27: #{tpu_custom_call.1} parent=19 // pred_region
          %s201 = sand.u32 %s85, 1
          %s202 = scalar_lea.sflag [#allocation7], %s201
          %s203 = sand.u32 %s85, 1
          %s204 = smul.addr %s203, 8
          %s205 = scalar_lea.vmem [#allocation6], %s204
          %s207 = ssub.s32 128, 128
          %208 = vsyncadd %s202, %s207
          %s209 = smul.addr %s27, 128
          %s210 = scalar_lea.hbm %s1, %s209
          %s212 = sshll.u32 %s205, 4
          %s213 = int_to_ptr.vmem [resolvable:$true] %s212
          %215 = dma.hbm_to_vmem [thread:$0]  %s210, 128, %s213, %s202
        $region28: #{tpu_custom_call.1} parent=19 // pred_fallthru
          _
      $region20: #{tpu_custom_call.1} parent=5 // pred_fallthru
        _
      %p216 = scmp.le.s32.totalorder 1, %s18
      %p217 = scmp.lt.s32.totalorder %s18, 25
      %p218 = pnand %p216, %p217
      %p219 = pneg %p218
      // Predicated region
      $region29: #{tpu_custom_call.1} parent=5 // pred_check
        _
      $region30: #{tpu_custom_call.1} parent=5 // pred_check_branch
        %221 = sbr.rel (%p218) target = $region32
      $region31: #{tpu_custom_call.1} parent=5 // pred_region
        %s222 = ssub.s32 %s18, 1
        %s223 = sand.u32 %s62, 1
        %s224 = scalar_lea.sflag [#allocation4], %s223
        %s225 = sand.u32 %s62, 1
        %s226 = smul.addr %s225, 24
        %s227 = scalar_lea.vmem [#allocation3], %s226
        // Predicated region
        $region33: #{tpu_custom_call.1} parent=31 // pred_check
          %p228 = pneg %p75
        $region34: #{tpu_custom_call.1} parent=31 // pred_check_branch
          %230 = sbr.rel (%p228) target = $region36
        $region35: #{tpu_custom_call.1} parent=31 // pred_region
          %231 = dma.done %s224, 384
        $region36: #{tpu_custom_call.1} parent=31 // pred_fallthru
          _
        %s232 = sand.u32 %s88, 1
        %s233 = scalar_lea.sflag [#allocation7], %s232
        %s234 = sand.u32 %s88, 1
        %s235 = smul.addr %s234, 8
        %s236 = scalar_lea.vmem [#allocation6], %s235
        // Predicated region
        $region37: #{tpu_custom_call.1} parent=31 // pred_check
          %p237 = pneg %p101
        $region38: #{tpu_custom_call.1} parent=31 // pred_check_branch
          %239 = sbr.rel (%p237) target = $region40
        $region39: #{tpu_custom_call.1} parent=31 // pred_region
          %240 = dma.done %s233, 128
        $region40: #{tpu_custom_call.1} parent=31 // pred_fallthru
          _
        %s241 = sand.u32 %s62, 1
        %s242 = scalar_lea.sflag [#allocation4], %s241
        %s243 = sand.u32 %s62, 1
        %s244 = smul.addr %s243, 24
        %s245 = scalar_lea.vmem [#allocation3], %s244
        %p246 = pneg %p75
        %p247 = pneg %p72
        %s248 = sand.u32 %s88, 1
        %s249 = scalar_lea.sflag [#allocation7], %s248
        %s250 = sand.u32 %s88, 1
        %s251 = smul.addr %s250, 8
        %s252 = scalar_lea.vmem [#allocation6], %s251
        %p253 = pneg %p101
        %p254 = pneg %p98
        %p255 = pneg %p122
        %p256 = pneg %p119
        %p257 = pneg %p150
        %p258 = pneg %p147
        %s259 = sand.u32 %s137, 1
        %s260 = scalar_lea.sflag [#allocation5], %s259
        %s261 = sand.u32 %s137, 1
        %s262 = smul.addr %s261, 24
        %s263 = scalar_lea.vmem [#allocation8], %s262
        %s264 = smul.u32 %s29, 2
        %s265 = sadd.s32 %s264, %s30
        %s266 = ssub.s32 %s265, 2
        %p267 = scmp.gt.s32.totalorder %s266, 0
        %s268 = scalar_select %p267, %s266, 0
        %p269 = scmp.eq.s32.totalorder %s30, 0
        // Predicated region
        $region41: #{tpu_custom_call.1} parent=31 // pred_check
          %p270 = pneg %p269
        $region42: #{tpu_custom_call.1} parent=31 // pred_check_branch
          %272 = sbr.rel (%p270) target = $region44
        $region43: #{tpu_custom_call.1} parent=31 // pred_region
          %v273 = vld [vmem:[%s2] sm:$0xff]
          %275 = vset.pattern.permute.xlu0 0
          %276 = vperm.xlu0 %275, %v273
          %v277 = vpop.permute.xlu0 %276
          %279 = vst [vmem:[#allocation2] sm:$0xff] %v277
          %280 = vst [vmem:[#allocation2 + $0x8] sm:$0xff] %v277
          %281 = vst [vmem:[#allocation2 + $0x10] sm:$0xff] %v277
        $region44: #{tpu_custom_call.1} parent=31 // pred_fallthru
          _
        %v282 = vld [vmem:[%s227] sm:$0xff]
        %v283 = vld [vmem:[%s227 + $0x8] sm:$0xff]
        %v284 = vld [vmem:[%s227 + $0x10] sm:$0xff]
        %285 = vrot.lane.b32.xlu0 %v282, 127
        %v286 = vpop.permute.xlu0 %285
        %287 = vrot.lane.b32.xlu0 %v283, 127
        %v288 = vpop.permute.xlu0 %287
        %289 = vrot.lane.b32.xlu0 %v284, 127
        %v290 = vpop.permute.xlu0 %289
        %v291 = vlaneseq
        %v292 = vand.u32 %v291, 127
        %vm293 = vcmp.lt.s32.totalorder %v292, 127
        %v294 = vsel %vm293, %v288, %v290
        %v295 = vsel %vm293, %v286, %v288
        %v296 = vsel %vm293, %v290, %v286
        %297 = vrot.lane.b32.xlu0 %v282, 126
        %v298 = vpop.permute.xlu0 %297
        %299 = vrot.lane.b32.xlu0 %v283, 126
        %v300 = vpop.permute.xlu0 %299
        %301 = vrot.lane.b32.xlu0 %v284, 126
        %v302 = vpop.permute.xlu0 %301
        %vm303 = vcmp.lt.s32.totalorder %v292, 126
        %v304 = vsel %vm303, %v300, %v302
        %v305 = vsel %vm303, %v298, %v300
        %v306 = vsel %vm303, %v302, %v298
        %307 = vrot.lane.b32.xlu0 %v282, 110
        %v308 = vpop.permute.xlu0 %307
        %309 = vrot.lane.b32.xlu0 %v283, 110
        %v310 = vpop.permute.xlu0 %309
        %311 = vrot.lane.b32.xlu0 %v284, 110
        %v312 = vpop.permute.xlu0 %311
        %vm313 = vcmp.lt.s32.totalorder %v292, 110
        %v314 = vsel %vm313, %v310, %v312
        %v315 = vsel %vm313, %v308, %v310
        %v316 = vsel %vm313, %v312, %v308
        %317 = vrot.lane.b32.xlu0 %v282, 109
        %v318 = vpop.permute.xlu0 %317
        %319 = vrot.lane.b32.xlu0 %v283, 109
        %v320 = vpop.permute.xlu0 %319
        %321 = vrot.lane.b32.xlu0 %v284, 109
        %v322 = vpop.permute.xlu0 %321
        %vm323 = vcmp.lt.s32.totalorder %v292, 109
        %v324 = vsel %vm323, %v320, %v322
        %v325 = vsel %vm323, %v318, %v320
        %v326 = vsel %vm323, %v322, %v318
        %327 = vrot.lane.b32.xlu0 %v282, 108
        %v328 = vpop.permute.xlu0 %327
        %329 = vrot.lane.b32.xlu0 %v283, 108
        %v330 = vpop.permute.xlu0 %329
        %331 = vrot.lane.b32.xlu0 %v284, 108
        %v332 = vpop.permute.xlu0 %331
        %vm333 = vcmp.lt.s32.totalorder %v292, 108
        %v334 = vsel %vm333, %v330, %v332
        %v335 = vsel %vm333, %v328, %v330
        %v336 = vsel %vm333, %v332, %v328
        %337 = vrot.lane.b32.xlu0 %v282, 92
        %v338 = vpop.permute.xlu0 %337
        %339 = vrot.lane.b32.xlu0 %v283, 92
        %v340 = vpop.permute.xlu0 %339
        %341 = vrot.lane.b32.xlu0 %v284, 92
        %v342 = vpop.permute.xlu0 %341
        %vm343 = vcmp.lt.s32.totalorder %v292, 92
        %v344 = vsel %vm343, %v340, %v342
        %v345 = vsel %vm343, %v338, %v340
        %v346 = vsel %vm343, %v342, %v338
        %347 = vrot.lane.b32.xlu0 %v282, 91
        %v348 = vpop.permute.xlu0 %347
        %349 = vrot.lane.b32.xlu0 %v283, 91
        %v350 = vpop.permute.xlu0 %349
        %351 = vrot.lane.b32.xlu0 %v284, 91
        %v352 = vpop.permute.xlu0 %351
        %vm353 = vcmp.lt.s32.totalorder %v292, 91
        %v354 = vsel %vm353, %v350, %v352
        %v355 = vsel %vm353, %v348, %v350
        %v356 = vsel %vm353, %v352, %v348
        %357 = vrot.lane.b32.xlu0 %v282, 90
        %v358 = vpop.permute.xlu0 %357
        %359 = vrot.lane.b32.xlu0 %v283, 90
        %v360 = vpop.permute.xlu0 %359
        %361 = vrot.lane.b32.xlu0 %v284, 90
        %v362 = vpop.permute.xlu0 %361
        %vm363 = vcmp.lt.s32.totalorder %v292, 90
        %v364 = vsel %vm363, %v360, %v362
        %v365 = vsel %vm363, %v358, %v360
        %v366 = vsel %vm363, %v362, %v358
        %v367 = vld [vmem:[#allocation2] sm:$0xff]
        %v368 = vld [vmem:[#allocation2 + $0x8] sm:$0xff]
        %v369 = vld [vmem:[#allocation2 + $0x10] sm:$0xff]
        %v370 = vld [vmem:[%s236] sm:$0xff]
        %vm371 = vcmask 588800
        %v373 = vsel %vm371, %v370, 0
        %375 = vmatprep.subr.mxu0 %v283
        %376 = vmatpush1.msra.mxu0 %v282
        %377 = vmatprep.subr.mxu0 %v294
        %378 = vmatpush1.msra.mxu0 %v295
        %379 = vmatprep.subr.mxu0 %v304
        %380 = vmatpush1.msra.mxu0 %v305
        %381 = vmatprep.subr.mxu0 %v314
        %382 = vmatpush1.msra.mxu0 %v315
        %383 = vmatprep.subr.mxu0 %v324
        %384 = vmatpush1.msra.mxu0 %v325
        %385 = vmatprep.subr.mxu0 %v334
        %386 = vmatpush1.msra.mxu0 %v335
        %387 = vmatprep.subr.mxu0 %v344
        %388 = vmatpush1.msra.mxu0 %v345
        %389 = vmatprep.subr.mxu0 %v354
        %390 = vmatpush1.msra.mxu0 %v355
        %391 = vmatprep.subr.mxu0 %v364
        %392 = vmatpush1.msra.mxu0 %v365
        %393 = vmatprep.subr.mxu0 0.0
        %394 = vmatpush1.msra.mxu0 0.0
        %395 = vmatprep.subr.mxu0 0.0
        %396 = vmatpush1.msra.mxu0 0.0
        %397 = vmatprep.subr.mxu0 0.0
        %398 = vmatpush1.msra.mxu0 0.0
        %399 = vmatprep.subr.mxu0 0.0
        %400 = vmatpush1.msra.mxu0 0.0
        %401 = vmatprep.subr.mxu0 0.0
        %402 = vmatpush1.msra.mxu0 0.0
        %403 = vmatprep.subr.mxu0 0.0
        %404 = vmatpush1.msra.mxu0 0.0
        %405 = vmatprep.subr.mxu0 0.0
        %406 = vmatpush1.msra.mxu0 0.0
        %407 = vmatprep.subr.mxu0 0.0
        %408 = vmatpush1.msra.mxu0 0.0
        %409 = vmatprep.subr.mxu0 0.0
        %410 = vmatpush1.msra.mxu0 0.0
        %411 = vmatprep.subr.mxu0 0.0
        %412 = vmatpush1.msra.mxu0 0.0
        %413 = vmatprep.subr.mxu0 0.0
        %414 = vmatpush1.msra.mxu0 0.0
        %415 = vmatprep.subr.mxu0 0.0
        %416 = vmatpush1.msra.mxu0 0.0
        %417 = vmatprep.subr.mxu0 0.0
        %418 = vmatpush1.msra.mxu0 0.0
        %419 = vmatprep.subr.mxu0 0.0
        %420 = vmatpush1.msra.mxu0 0.0
        %421 = vmatprep.subr.mxu0 0.0
        %422 = vmatpush1.msra.mxu0 0.0
        %423 = vmatprep.subr.mxu0 0.0
        %424 = vmatpush1.msra.mxu0 0.0
        %425 = vmatprep.subr.mxu0 0.0
        %426 = vmatpush1.msra.mxu0 0.0
        %427 = vmatprep.subr.mxu0 0.0
        %428 = vmatpush1.msra.mxu0 0.0
        %429 = vmatprep.subr.mxu0 0.0
        %430 = vmatpush1.msra.mxu0 0.0
        %431 = vmatprep.subr.mxu0 0.0
        %432 = vmatpush1.msra.mxu0 0.0
        %433 = vmatprep.subr.mxu0 0.0
        %434 = vmatpush1.msra.mxu0 0.0
        %435 = vmatprep.subr.mxu0 0.0
        %436 = vmatpush1.msra.mxu0 0.0
        %437 = vmatprep.subr.mxu0 0.0
        %438 = vmatpush1.msra.mxu0 0.0
        %439 = vmatprep.mubr.f32.mxu0 0.0
        %440 = vmatmul.mubr.f32.gmra.mrb[0].mxu0 %v373
        %v441 = vpop.f32.mrb[0].mxu0
        %v442 = vadd.f32 0.0, %v441
        %v443 = vpop.f32.mrb[0].mxu0
        %v444 = vadd.f32 0.0, %v443
        %445 = vdwg.mxu0
        %446 = vmatprep.subr.mxu0 0.0
        %447 = vmatpush1.msra.mxu0 %v284
        %448 = vmatprep.subr.mxu0 0.0
        %449 = vmatpush1.msra.mxu0 %v296
        %450 = vmatprep.subr.mxu0 0.0
        %451 = vmatpush1.msra.mxu0 %v306
        %452 = vmatprep.subr.mxu0 0.0
        %453 = vmatpush1.msra.mxu0 %v316
        %454 = vmatprep.subr.mxu0 0.0
        %455 = vmatpush1.msra.mxu0 %v326
        %456 = vmatprep.subr.mxu0 0.0
        %457 = vmatpush1.msra.mxu0 %v336
        %458 = vmatprep.subr.mxu0 0.0
        %459 = vmatpush1.msra.mxu0 %v346
        %460 = vmatprep.subr.mxu0 0.0
        %461 = vmatpush1.msra.mxu0 %v356
        %462 = vmatprep.subr.mxu0 0.0
        %463 = vmatpush1.msra.mxu0 %v366
        %464 = vmatprep.subr.mxu0 0.0
        %465 = vmatpush1.msra.mxu0 0.0
        %466 = vmatprep.subr.mxu0 0.0
        %467 = vmatpush1.msra.mxu0 0.0
        %468 = vmatprep.subr.mxu0 0.0
        %469 = vmatpush1.msra.mxu0 0.0
        %470 = vmatprep.subr.mxu0 0.0
        %471 = vmatpush1.msra.mxu0 0.0
        %472 = vmatprep.subr.mxu0 0.0
        %473 = vmatpush1.msra.mxu0 0.0
        %474 = vmatprep.subr.mxu0 0.0
        %475 = vmatpush1.msra.mxu0 0.0
        %476 = vmatprep.subr.mxu0 0.0
        %477 = vmatpush1.msra.mxu0 0.0
        %478 = vmatprep.subr.mxu0 0.0
        %479 = vmatpush1.msra.mxu0 0.0
        %480 = vmatprep.subr.mxu0 0.0
        %481 = vmatpush1.msra.mxu0 0.0
        %482 = vmatprep.subr.mxu0 0.0
        %483 = vmatpush1.msra.mxu0 0.0
        %484 = vmatprep.subr.mxu0 0.0
        %485 = vmatpush1.msra.mxu0 0.0
        %486 = vmatprep.subr.mxu0 0.0
        %487 = vmatpush1.msra.mxu0 0.0
        %488 = vmatprep.subr.mxu0 0.0
        %489 = vmatpush1.msra.mxu0 0.0
        %490 = vmatprep.subr.mxu0 0.0
        %491 = vmatpush1.msra.mxu0 0.0
        %492 = vmatprep.subr.mxu0 0.0
        %493 = vmatpush1.msra.mxu0 0.0
        %494 = vmatprep.subr.mxu0 0.0
        %495 = vmatpush1.msra.mxu0 0.0
        %496 = vmatprep.subr.mxu0 0.0
        %497 = vmatpush1.msra.mxu0 0.0
        %498 = vmatprep.subr.mxu0 0.0
        %499 = vmatpush1.msra.mxu0 0.0
        %500 = vmatprep.subr.mxu0 0.0
        %501 = vmatpush1.msra.mxu0 0.0
        %502 = vmatprep.subr.mxu0 0.0
        %503 = vmatpush1.msra.mxu0 0.0
        %504 = vmatprep.subr.mxu0 0.0
        %505 = vmatpush1.msra.mxu0 0.0
        %506 = vmatprep.subr.mxu0 0.0
        %507 = vmatpush1.msra.mxu0 0.0
        %508 = vmatprep.subr.mxu0 0.0
        %509 = vmatpush1.msra.mxu0 0.0
        %510 = vmatprep.mubr.f32.mxu0 0.0
        %511 = vmatmul.mubr.f32.gmra.mrb[0].mxu0 %v373
        %v512 = vpop.f32.mrb[0].mxu0
        %v513 = vadd.f32 0.0, %v512
        %v514 = vpop.f32.mrb[0].mxu0
        %515 = vdwg.mxu0
        %v516 = vadd.f32 %v367, %v442
        %v517 = vadd.f32 %v368, %v444
        %v518 = vadd.f32 %v369, %v513
        %519 = vst [vmem:[#allocation2] sm:$0xff] %v516
        %520 = vst [vmem:[#allocation2 + $0x8] sm:$0xff] %v517
        %521 = vst [vmem:[#allocation2 + $0x10] sm:$0xff] %v518
        %p522 = scmp.eq.s32.totalorder %s30, 2
        // Predicated region
        $region45: #{tpu_custom_call.1} parent=31 // pred_check
          %p523 = pneg %p522
        $region46: #{tpu_custom_call.1} parent=31 // pred_check_branch
          %525 = sbr.rel (%p523) target = $region48
        $region47: #{tpu_custom_call.1} parent=31 // pred_region
          %v526 = vld [vmem:[#allocation2] sm:$0xff]
          %v527 = vld [vmem:[#allocation2 + $0x8] sm:$0xff]
          %v528 = vld [vmem:[#allocation2 + $0x10] sm:$0xff]
          %529 = vst [vmem:[%s263] sm:$0xff] %v526
          %530 = vst [vmem:[%s263 + $0x8] sm:$0xff] %v527
          %531 = vst [vmem:[%s263 + $0x10] sm:$0xff] %v528
        $region48: #{tpu_custom_call.1} parent=31 // pred_fallthru
          _
        %s532 = sand.u32 %s137, 1
        %s533 = scalar_lea.sflag [#allocation5], %s532
        %s534 = sand.u32 %s137, 1
        %s535 = smul.addr %s534, 24
        %s536 = scalar_lea.vmem [#allocation8], %s535
        // Predicated region
        $region49: #{tpu_custom_call.1} parent=31 // pred_check
          %p537 = pneg %p147
        $region50: #{tpu_custom_call.1} parent=31 // pred_check_branch
          %539 = sbr.rel (%p537) target = $region52
        $region51: #{tpu_custom_call.1} parent=31 // pred_region
          %s541 = ssub.s32 384, 384
          %542 = vsyncadd %s533, %s541
          %s543 = smul.addr %s29, 3
          %s544 = smul.addr %s28, 12
          %s545 = sadd.s32 %s543, %s544
          %s546 = smul.addr %s545, 128
          %s547 = scalar_lea.hbm %s3, %s546
          %s549 = sshll.u32 %s536, 4
          %s550 = int_to_ptr.vmem [resolvable:$true] %s549
          %552 = dma.vmem_to_hbm [thread:$0]  %s550, 384, %s547, %s533
        $region52: #{tpu_custom_call.1} parent=31 // pred_fallthru
          _
      $region32: #{tpu_custom_call.1} parent=5 // pred_fallthru
        _
      %p553 = scmp.le.s32.totalorder 2, %s18
      // Predicated region
      $region53: #{tpu_custom_call.1} parent=5 // pred_check
        %p554 = pneg %p553
      $region54: #{tpu_custom_call.1} parent=5 // pred_check_branch
        %556 = sbr.rel (%p554) target = $region56
      $region55: #{tpu_custom_call.1} parent=5 // pred_region
        %s557 = ssub.s32 %s18, 2
        // Predicated region
        $region57: #{tpu_custom_call.1} parent=55 // pred_check
          %p558 = pneg %p153
        $region58: #{tpu_custom_call.1} parent=55 // pred_check_branch
          %560 = sbr.rel (%p558) target = $region60
        $region59: #{tpu_custom_call.1} parent=55 // pred_region
          %s561 = sand.u32 %s138, 1
          %s562 = scalar_lea.sflag [#allocation5], %s561
          %s563 = sand.u32 %s138, 1
          %s564 = smul.addr %s563, 24
          %s565 = scalar_lea.vmem [#allocation8], %s564
          %566 = dma.done %s562, 384
        $region60: #{tpu_custom_call.1} parent=55 // pred_fallthru
          _
      $region56: #{tpu_custom_call.1} parent=5 // pred_fallthru
        _
    $region6: #{tpu_custom_call.1} parent=1 // loop_footer
      %s22 = sadd.s32 1, %s18
    $region7: #{tpu_custom_call.1} parent=1 // loop_footer_branch
      %17 = sbr.rel target = $region3
    $region8: #{tpu_custom_call.1} parent=1 // loop_exit
      _
    %567 = vsyncpa [#allocation4], 1
    %s568 = scalar_lea.sflag [#allocation4], 1
    %569 = vsyncpa %s568, 1
    %570 = vsyncpa [#allocation7], 1
    %s571 = scalar_lea.sflag [#allocation7], 1
    %572 = vsyncpa %s571, 1
    %573 = vsyncpa [#allocation5], 1
    %s574 = scalar_lea.sflag [#allocation5], 1
    %575 = vsyncpa %s574, 1

</llo_original>
